<compile_context>
chip_gen: v5e
topology: v5e:2x2
jax: 0.10.0
libtpu: 0.0.40
codegen_flags: <defaults>
</compile_context>

<pallas_src>
import jax
import jax.numpy as jnp
from jax.experimental import pallas as pl
from jax.experimental.pallas import tpu as pltpu

# ----------------------------- model config ---------------------------------
VOCAB = 50          # vocab_size
EMBED = 16          # embed_size
HID = 32            # hidden_size  (4H = 128 -> one full lane group)
VPAD = 128          # vocab padded to a full 128-lane vreg
NEG_INF = -1e30

_VMEM = pl.BlockSpec(memory_space=pltpu.MemorySpace.VMEM)


# ------------------------------ Pallas kernel --------------------------------
def _decoder_step_kernel(tok_ref, h_ref, c_ref, ctx_ref,
                         embw_ref, whh_ref, blstm_ref,
                         w1h_ref, w1c_ref, b1_ref,
                         w2_ref, b2_ref,
                         p_out, h_out, c_out):
    """Fused: embedding -> LSTM step -> W1 -> W2 -> softmax (padded vocab)."""
    B, H = h_ref.shape
    V = embw_ref.shape[0]

    # Embedding lookup fused into the input->hidden projection:
    #   x = onehot(tok) @ Emb ;  x @ W_ih^T == onehot @ (Emb @ W_ih^T)
    tok = tok_ref[...]                                           # (B, 1) int32
    cols = jax.lax.broadcasted_iota(jnp.int32, (B, V), 1)
    onehot = (cols == tok).astype(jnp.float32)                   # (B, V)

    # LSTM gates, PyTorch order (i, f, g, o); output is (B, 4H) = (B, 128).
    gates = (jnp.dot(onehot, embw_ref[...], preferred_element_type=jnp.float32)
             + jnp.dot(h_ref[...], whh_ref[...], preferred_element_type=jnp.float32)
             + blstm_ref[...])
    i = jax.nn.sigmoid(gates[:, 0:H])
    f = jax.nn.sigmoid(gates[:, H:2 * H])
    g = jnp.tanh(gates[:, 2 * H:3 * H])
    o = jax.nn.sigmoid(gates[:, 3 * H:4 * H])
    c_new = f * c_ref[...] + i * g
    h_new = o * jnp.tanh(c_new)
    h_out[...] = h_new
    c_out[...] = c_new

    # W1([decoder_output ; context_vector]) as two lane-aligned matmuls.
    ff1 = (jnp.dot(h_new, w1h_ref[...], preferred_element_type=jnp.float32)
           + jnp.dot(ctx_ref[...], w1c_ref[...], preferred_element_type=jnp.float32)
           + b1_ref[...])                                        # (B, H)

    # W2 -> logits over the 128-lane padded vocab (padding bias = -1e30).
    ff2 = (jnp.dot(ff1, w2_ref[...], preferred_element_type=jnp.float32)
           + b2_ref[...])                                        # (B, VPAD)

    # Numerically-stable softmax on the lane-dense padded axis.
    m = jnp.max(ff2, axis=1, keepdims=True)
    e = jnp.exp(ff2 - m)
    denom = jnp.sum(e, axis=1, keepdims=True)
    p_out[...] = e * pl.reciprocal(denom, approx=True)


# ------------------------------ wrapper --------------------------------------
@jax.jit
def decoder_forward(params, decoder_input, decoder_states, encoder_output,
                    context_vector):
    """Mirrors Decoder.forward. encoder_output is unused (as in the reference)."""
    del encoder_output
    h0, c0 = decoder_states                       # (1, B, H) each
    B = decoder_input.shape[0]
    h0 = h0.reshape(B, HID).astype(jnp.float32)
    c0 = c0.reshape(B, HID).astype(jnp.float32)
    tok = decoder_input.reshape(B, 1).astype(jnp.int32)
    ctx = context_vector.astype(jnp.float32)

    p_pad, h_n, c_n = pl.pallas_call(
        _decoder_step_kernel,
        in_specs=[_VMEM] * 12,
        out_specs=(_VMEM, _VMEM, _VMEM),
        out_shape=(jax.ShapeDtypeStruct((B, VPAD), jnp.float32),
                   jax.ShapeDtypeStruct((B, HID), jnp.float32),
                   jax.ShapeDtypeStruct((B, HID), jnp.float32)),
        input_output_aliases={1: 1, 2: 2},        # h -> h_out, c -> c_out
    )(tok, h0, c0, ctx,
      params['embw_ih'], params['whh_t'], params['b_lstm'],
      params['w1h'], params['w1c'], params['b1'],
      params['w2_pad'], params['b2_pad'])

    p_vocab = p_pad[:, :VOCAB]
    return p_vocab, (h_n.reshape(1, B, HID), c_n.reshape(1, B, HID))


# ------------------------------ parameters -----------------------------------
def init_params(key):
    ks = jax.random.split(key, 9)

    def norm(k, shape, scale=0.1):
        return scale * jax.random.normal(k, shape, jnp.float32)

    # Raw parameters in PyTorch layout.
    embedding = norm(ks[0], (VOCAB, EMBED))            # nn.Embedding.weight
    w_ih = norm(ks[1], (4 * HID, EMBED))               # lstm.weight_ih_l0
    w_hh = norm(ks[2], (4 * HID, HID))                 # lstm.weight_hh_l0
    b_ih = norm(ks[3], (4 * HID,))
    b_hh = norm(ks[4], (4 * HID,))
    w1 = norm(ks[5], (HID, 3 * HID))                   # W1.weight (out, in)
    b1 = norm(ks[6], (HID,))
    w2 = norm(ks[7], (VOCAB, HID))                     # W2.weight
    b2 = norm(ks[8], (VOCAB,))

    params = {
        # embedding fused with the input->hidden projection: (V, 4H)
        'embw_ih': embedding @ w_ih.T,
        'whh_t': w_hh.T,                               # (H, 4H)
        'b_lstm': (b_ih + b_hh).reshape(1, 4 * HID),
        'w1h': w1.T[:HID, :],                          # acts on decoder_output
        'w1c': w1.T[HID:, :],                          # acts on context_vector
        'b1': b1.reshape(1, HID),
        # vocab axis zero-padded to 128 lanes; padded logits get -1e30 bias
        'w2_pad': jnp.pad(w2.T, ((0, 0), (0, VPAD - VOCAB))),
        'b2_pad': jnp.concatenate(
            [b2, jnp.full((VPAD - VOCAB,), NEG_INF, jnp.float32)]
        ).reshape(1, VPAD),
    }
    raw = (embedding, w_ih, w_hh, b_ih, b_hh, w1, b1, w2, b2)
    return params, raw


# ------------------------- pure-JAX reference (for checking) -----------------
def reference_forward(raw, decoder_input, decoder_states, context_vector):
    embedding, w_ih, w_hh, b_ih, b_hh, w1, b1, w2, b2 = raw
    h0, c0 = decoder_states
    B = decoder_input.shape[0]
    h = h0.reshape(B, HID)
    c = c0.reshape(B, HID)
    x = embedding[decoder_input.reshape(B)]
    gates = x @ w_ih.T + h @ w_hh.T + b_ih + b_hh
    i = jax.nn.sigmoid(gates[:, 0:HID])
    f = jax.nn.sigmoid(gates[:, HID:2 * HID])
    g = jnp.tanh(gates[:, 2 * HID:3 * HID])
    o = jax.nn.sigmoid(gates[:, 3 * HID:4 * HID])
    c_n = f * c + i * g
    h_n = o * jnp.tanh(c_n)
    concat = jnp.concatenate([h_n, context_vector], axis=-1)
    ff1 = concat @ w1.T + b1
    ff2 = ff1 @ w2.T + b2
    p = jax.nn.softmax(ff2, axis=1)
    return p, (h_n.reshape(1, B, HID), c_n.reshape(1, B, HID))


# ------------------------------------ main ------------------------------------
if __name__ == "__main__":
    key = jax.random.PRNGKey(0)
    pk, ik, hk, ck, ek, xk = jax.random.split(key, 6)
    params, raw = init_params(pk)

    B, S = 2, 8
    decoder_input = jax.random.randint(ik, (B, 1), 0, VOCAB, dtype=jnp.int32)
    h0 = 0.1 * jax.random.normal(hk, (1, B, HID), jnp.float32)
    c0 = 0.1 * jax.random.normal(ck, (1, B, HID), jnp.float32)
    encoder_output = 0.1 * jax.random.normal(ek, (B, S, 2 * HID), jnp.float32)
    context_vector = 0.1 * jax.random.normal(xk, (B, 2 * HID), jnp.float32)

    p_vocab, (h_n, c_n) = decoder_forward(params, decoder_input, (h0, c0),
                                          encoder_output, context_vector)
    p_vocab, h_n, c_n = jax.block_until_ready((p_vocab, h_n, c_n))

    # Sanity checks against a pure-JAX reference of the same forward pass.
    p_ref, (h_ref, c_ref) = reference_forward(raw, decoder_input, (h0, c0),
                                              context_vector)
    assert p_vocab.shape == (B, VOCAB)
    assert bool(jnp.all(jnp.isfinite(p_vocab)))
    assert bool(jnp.all(jnp.abs(jnp.sum(p_vocab, axis=-1) - 1.0) < 5e-2))
    assert bool(jnp.max(jnp.abs(p_vocab - p_ref)) < 5e-2)
    assert bool(jnp.max(jnp.abs(h_n - h_ref)) < 1e-3)
    assert bool(jnp.max(jnp.abs(c_n - c_ref)) < 1e-3)
    print("KERNEL_OK")
</pallas_src>

<mosaic_0001>
module attributes {stable_mosaic.version = 11 : i64} {
  func.func @_decoder_step_kernel(%arg0: memref<2x1xi32, #tpu.memory_space<vmem>>, %arg1: memref<2x32xf32, #tpu.memory_space<vmem>>, %arg2: memref<2x32xf32, #tpu.memory_space<vmem>>, %arg3: memref<2x64xf32, #tpu.memory_space<vmem>>, %arg4: memref<50x128xf32, #tpu.memory_space<vmem>>, %arg5: memref<32x128xf32, #tpu.memory_space<vmem>>, %arg6: memref<1x128xf32, #tpu.memory_space<vmem>>, %arg7: memref<32x32xf32, #tpu.memory_space<vmem>>, %arg8: memref<64x32xf32, #tpu.memory_space<vmem>>, %arg9: memref<1x32xf32, #tpu.memory_space<vmem>>, %arg10: memref<32x128xf32, #tpu.memory_space<vmem>>, %arg11: memref<1x128xf32, #tpu.memory_space<vmem>>, %arg12: memref<2x128xf32, #tpu.memory_space<vmem>>, %arg13: memref<2x32xf32, #tpu.memory_space<vmem>>, %arg14: memref<2x32xf32, #tpu.memory_space<vmem>>) attributes {dimension_semantics = [], scalar_prefetch = 0 : i64, scratch_operands = 0 : i64, tpu.core_type = #tpu.core_type<tc>} {
    %c0 = arith.constant 0 : index
    %c0_0 = arith.constant 0 : index
    %0 = vector.load %arg0[%c0, %c0_0] : memref<2x1xi32, #tpu.memory_space<vmem>>, vector<2x1xi32>
    %1 = tpu.iota {dimensions = array<i32: 1>} : vector<2x50xi32>
    %2 = vector.broadcast %0 : vector<2x1xi32> to vector<2x50xi32>
    %3 = arith.cmpi eq, %1, %2 : vector<2x50xi32>
    %4 = arith.extui %3 : vector<2x50xi1> to vector<2x50xi32>
    %5 = arith.sitofp %4 : vector<2x50xi32> to vector<2x50xf32>
    %c0_1 = arith.constant 0 : index
    %c0_2 = arith.constant 0 : index
    %6 = vector.load %arg4[%c0_1, %c0_2] : memref<50x128xf32, #tpu.memory_space<vmem>>, vector<50x128xf32>
    %cst = arith.constant dense<0.000000e+00> : vector<2x128xf32>
    %7 = tpu.matmul %5, %6, %cst {dimension_numbers = #tpu.dot_dimension_numbers<[1], [0], [0], [1], [0, 0, 1, 1], [], []>} : vector<2x50xf32>, vector<50x128xf32>, vector<2x128xf32> -> vector<2x128xf32>
    %c0_3 = arith.constant 0 : index
    %c0_4 = arith.constant 0 : index
    %8 = vector.load %arg1[%c0_3, %c0_4] : memref<2x32xf32, #tpu.memory_space<vmem>>, vector<2x32xf32>
    %c0_5 = arith.constant 0 : index
    %c0_6 = arith.constant 0 : index
    %9 = vector.load %arg5[%c0_5, %c0_6] : memref<32x128xf32, #tpu.memory_space<vmem>>, vector<32x128xf32>
    %cst_7 = arith.constant dense<0.000000e+00> : vector<2x128xf32>
    %10 = tpu.matmul %8, %9, %cst_7 {dimension_numbers = #tpu.dot_dimension_numbers<[1], [0], [0], [1], [0, 0, 1, 1], [], []>} : vector<2x32xf32>, vector<32x128xf32>, vector<2x128xf32> -> vector<2x128xf32>
    %11 = arith.addf %7, %10 : vector<2x128xf32>
    %c0_8 = arith.constant 0 : index
    %c0_9 = arith.constant 0 : index
    %12 = vector.load %arg6[%c0_8, %c0_9] : memref<1x128xf32, #tpu.memory_space<vmem>>, vector<1x128xf32>
    %13 = vector.broadcast %12 : vector<1x128xf32> to vector<2x128xf32>
    %14 = arith.addf %11, %13 : vector<2x128xf32>
    %15 = vector.extract_strided_slice %14 {offsets = [0, 0], sizes = [2, 32], strides = [1, 1]} : vector<2x128xf32> to vector<2x32xf32>
    %16 = arith.negf %15 : vector<2x32xf32>
    %17 = math.exp %16 : vector<2x32xf32>
    %cst_10 = arith.constant 1.000000e+00 : f32
    %18 = vector.broadcast %cst_10 : f32 to vector<2x32xf32>
    %19 = arith.addf %18, %17 : vector<2x32xf32>
    %20 = arith.divf %18, %19 : vector<2x32xf32>
    %21 = vector.extract_strided_slice %14 {offsets = [0, 32], sizes = [2, 32], strides = [1, 1]} : vector<2x128xf32> to vector<2x32xf32>
    %22 = arith.negf %21 : vector<2x32xf32>
    %23 = math.exp %22 : vector<2x32xf32>
    %cst_11 = arith.constant 1.000000e+00 : f32
    %24 = vector.broadcast %cst_11 : f32 to vector<2x32xf32>
    %25 = arith.addf %24, %23 : vector<2x32xf32>
    %26 = arith.divf %24, %25 : vector<2x32xf32>
    %27 = vector.extract_strided_slice %14 {offsets = [0, 64], sizes = [2, 32], strides = [1, 1]} : vector<2x128xf32> to vector<2x32xf32>
    %28 = math.tanh %27 : vector<2x32xf32>
    %29 = vector.extract_strided_slice %14 {offsets = [0, 96], sizes = [2, 32], strides = [1, 1]} : vector<2x128xf32> to vector<2x32xf32>
    %30 = arith.negf %29 : vector<2x32xf32>
    %31 = math.exp %30 : vector<2x32xf32>
    %cst_12 = arith.constant 1.000000e+00 : f32
    %32 = vector.broadcast %cst_12 : f32 to vector<2x32xf32>
    %33 = arith.addf %32, %31 : vector<2x32xf32>
    %34 = arith.divf %32, %33 : vector<2x32xf32>
    %c0_13 = arith.constant 0 : index
    %c0_14 = arith.constant 0 : index
    %35 = vector.load %arg2[%c0_13, %c0_14] : memref<2x32xf32, #tpu.memory_space<vmem>>, vector<2x32xf32>
    %36 = arith.mulf %26, %35 : vector<2x32xf32>
    %37 = arith.mulf %20, %28 : vector<2x32xf32>
    %38 = arith.addf %36, %37 : vector<2x32xf32>
    %39 = math.tanh %38 : vector<2x32xf32>
    %40 = arith.mulf %34, %39 : vector<2x32xf32>
    %c0_15 = arith.constant 0 : index
    %c0_16 = arith.constant 0 : index
    %41 = vector.load %arg13[%c0_15, %c0_16] : memref<2x32xf32, #tpu.memory_space<vmem>>, vector<2x32xf32>
    tpu.vector_store %arg13[%c0_15, %c0_16], %40 {strides = array<i32>} : memref<2x32xf32, #tpu.memory_space<vmem>>, vector<2x32xf32>,
    %c0_17 = arith.constant 0 : index
    %c0_18 = arith.constant 0 : index
    %42 = vector.load %arg14[%c0_17, %c0_18] : memref<2x32xf32, #tpu.memory_space<vmem>>, vector<2x32xf32>
    tpu.vector_store %arg14[%c0_17, %c0_18], %38 {strides = array<i32>} : memref<2x32xf32, #tpu.memory_space<vmem>>, vector<2x32xf32>,
    %c0_19 = arith.constant 0 : index
    %c0_20 = arith.constant 0 : index
    %43 = vector.load %arg7[%c0_19, %c0_20] : memref<32x32xf32, #tpu.memory_space<vmem>>, vector<32x32xf32>
    %cst_21 = arith.constant dense<0.000000e+00> : vector<2x32xf32>
    %44 = tpu.matmul %40, %43, %cst_21 {dimension_numbers = #tpu.dot_dimension_numbers<[1], [0], [0], [1], [0, 0, 1, 1], [], []>} : vector<2x32xf32>, vector<32x32xf32>, vector<2x32xf32> -> vector<2x32xf32>
    %c0_22 = arith.constant 0 : index
    %c0_23 = arith.constant 0 : index
    %45 = vector.load %arg3[%c0_22, %c0_23] : memref<2x64xf32, #tpu.memory_space<vmem>>, vector<2x64xf32>
    %c0_24 = arith.constant 0 : index
    %c0_25 = arith.constant 0 : index
    %46 = vector.load %arg8[%c0_24, %c0_25] : memref<64x32xf32, #tpu.memory_space<vmem>>, vector<64x32xf32>
    %cst_26 = arith.constant dense<0.000000e+00> : vector<2x32xf32>
    %47 = tpu.matmul %45, %46, %cst_26 {dimension_numbers = #tpu.dot_dimension_numbers<[1], [0], [0], [1], [0, 0, 1, 1], [], []>} : vector<2x64xf32>, vector<64x32xf32>, vector<2x32xf32> -> vector<2x32xf32>
    %48 = arith.addf %44, %47 : vector<2x32xf32>
    %c0_27 = arith.constant 0 : index
    %c0_28 = arith.constant 0 : index
    %49 = vector.load %arg9[%c0_27, %c0_28] : memref<1x32xf32, #tpu.memory_space<vmem>>, vector<1x32xf32>
    %50 = vector.broadcast %49 : vector<1x32xf32> to vector<2x32xf32>
    %51 = arith.addf %48, %50 : vector<2x32xf32>
    %c0_29 = arith.constant 0 : index
    %c0_30 = arith.constant 0 : index
    %52 = vector.load %arg10[%c0_29, %c0_30] : memref<32x128xf32, #tpu.memory_space<vmem>>, vector<32x128xf32>
    %cst_31 = arith.constant dense<0.000000e+00> : vector<2x128xf32>
    %53 = tpu.matmul %51, %52, %cst_31 {dimension_numbers = #tpu.dot_dimension_numbers<[1], [0], [0], [1], [0, 0, 1, 1], [], []>} : vector<2x32xf32>, vector<32x128xf32>, vector<2x128xf32> -> vector<2x128xf32>
    %c0_32 = arith.constant 0 : index
    %c0_33 = arith.constant 0 : index
    %54 = vector.load %arg11[%c0_32, %c0_33] : memref<1x128xf32, #tpu.memory_space<vmem>>, vector<1x128xf32>
    %55 = vector.broadcast %54 : vector<1x128xf32> to vector<2x128xf32>
    %56 = arith.addf %53, %55 : vector<2x128xf32>
    %cst_34 = arith.constant dense<0xFF800000> : vector<2xf32>
    %57 = vector.multi_reduction <maximumf>, %56, %cst_34 [1] : vector<2x128xf32> to vector<2xf32>
    %58 = vector.shape_cast %57 : vector<2xf32> to vector<2x1xf32>
    %59 = vector.broadcast %58 : vector<2x1xf32> to vector<2x128xf32>
    %60 = arith.subf %56, %59 : vector<2x128xf32>
    %61 = math.exp %60 : vector<2x128xf32>
    %cst_35 = arith.constant dense<0.000000e+00> : vector<2xf32>
    %62 = vector.multi_reduction <add>, %61, %cst_35 [1] : vector<2x128xf32> to vector<2xf32>
    %63 = vector.shape_cast %62 : vector<2xf32> to vector<2x1xf32>
    %64 = tpu.reciprocal %63 {approx = true} : vector<2x1xf32> -> vector<2x1xf32>
    %65 = vector.broadcast %64 : vector<2x1xf32> to vector<2x128xf32>
    %66 = arith.mulf %61, %65 : vector<2x128xf32>
    %c0_36 = arith.constant 0 : index
    %c0_37 = arith.constant 0 : index
    %67 = vector.load %arg12[%c0_36, %c0_37] : memref<2x128xf32, #tpu.memory_space<vmem>>, vector<2x128xf32>
    tpu.vector_store %arg12[%c0_36, %c0_37], %66 {strides = array<i32>} : memref<2x128xf32, #tpu.memory_space<vmem>>, vector<2x128xf32>,
    return
  }
}

</mosaic_0001>

<llo_original>
// kernel: decoder_forward.1
$region0: #{decoder_forward.1}
  #allocation0 [shape = 'u32[]', space=smem, size = 0x4, offset = 0x4, fixed_abs, tag = 'smem constant byte address 0x4 - core index']
  #allocation1 [shape = 'u32[72,128]{1,0:T(1,128)}', space=vmem, size = 0x9000, scoped, tag = 'internal scratch']
  %s0 = inlined_call_operand.vmem [shape: s32[2,1], index: 0, kind: input, shape index: {}]
  %s1 = inlined_call_operand.vmem [shape: f32[2,32], index: 1, kind: input, shape index: {}, may-alias: {1,13}]
  %s2 = inlined_call_operand.vmem [shape: f32[2,32], index: 2, kind: input, shape index: {}, may-alias: {2,14}]
  %s3 = inlined_call_operand.vmem [shape: f32[2,64], index: 3, kind: input, shape index: {}]
  %s4 = inlined_call_operand.vmem [shape: f32[50,128], index: 4, kind: input, shape index: {}]
  %s5 = inlined_call_operand.vmem [shape: f32[32,128], index: 5, kind: input, shape index: {}]
  %s6 = inlined_call_operand.vmem [shape: f32[1,128], index: 6, kind: input, shape index: {}]
  %s7 = inlined_call_operand.hbm [shape: f32[32,32], index: 7, kind: input, shape index: {}]
  %s8 = inlined_call_operand.vmem [shape: f32[64,32], index: 8, kind: input, shape index: {}]
  %s9 = inlined_call_operand.vmem [shape: f32[1,32], index: 9, kind: input, shape index: {}]
  %s10 = inlined_call_operand.hbm [shape: f32[32,128], index: 10, kind: input, shape index: {}]
  %s11 = inlined_call_operand.vmem [shape: f32[1,128], index: 11, kind: input, shape index: {}]
  %s12 = inlined_call_operand.hbm [shape: f32[2,128], index: 12, kind: output, shape index: {0}]
  %s13 = inlined_call_operand.vmem [shape: f32[2,32], index: 13, kind: output, shape index: {1}, may-alias: {1,13}]
  %s14 = inlined_call_operand.vmem [shape: f32[2,32], index: 14, kind: output, shape index: {2}, may-alias: {2,14}]
  %15 = xla_tuple %s12, %s13, %s14
  %s16 = sld [smem:[#allocation0]]
  $region82: #{decoder_forward.1} parent=0
    _
  %s18 = ssub.s32 1, %s16
  %s19 = scalar_select 0, %s18, %s16
  $region1: #{decoder_forward.1} parent=0
    #allocation2 [shape = 'u8[16384]{0}', space=vmem, size = 0x4000, scoped, tag = 'input window, operand 7, single buffered']
    #allocation3 [shape = 's32[1]{0}', space=sflag, size = 0x4, scoped, tag = 'scoped memory for decoder_forward.1']
    #allocation4 [shape = 's32[1]{0}', space=sflag, size = 0x4, scoped, tag = 'scoped memory for decoder_forward.1']
    #allocation5 [shape = 'u8[16384]{0}', space=vmem, size = 0x4000, scoped, tag = 'input window, operand 10, single buffered']
    #allocation6 [shape = 's32[1]{0}', space=sflag, size = 0x4, scoped, tag = 'scoped memory for decoder_forward.1']
    #allocation7 [shape = 'u8[1024]{0}', space=vmem, size = 0x400, scoped, tag = 'output window, operand 0, single buffered']
    %20 = vsyncpa [#allocation3], 0
    %21 = vsyncpa [#allocation6], 0
    %22 = vsyncpa [#allocation4], 0
    // Predicated region
    $region2: #{decoder_forward.1} parent=1 // pred_check
      _
    $region3: #{decoder_forward.1} parent=1 // pred_check_branch
      %24 = sbr.rel (0) target = $region5
    $region4: #{decoder_forward.1} parent=1 // pred_region
      _
    $region5: #{decoder_forward.1} parent=1 // pred_fallthru
      _
    // Predicated region
    $region6: #{decoder_forward.1} parent=1 // pred_check
      _
    $region7: #{decoder_forward.1} parent=1 // pred_check_branch
      %26 = sbr.rel (0) target = $region9
    $region8: #{decoder_forward.1} parent=1 // pred_region
      _
    $region9: #{decoder_forward.1} parent=1 // pred_fallthru
      _
    // Predicated region
    $region10: #{decoder_forward.1} parent=1 // pred_check
      _
    $region11: #{decoder_forward.1} parent=1 // pred_check_branch
      %28 = sbr.rel (0) target = $region13
    $region12: #{decoder_forward.1} parent=1 // pred_region
      _
    $region13: #{decoder_forward.1} parent=1 // pred_fallthru
      _
    // Predicated region
    $region14: #{decoder_forward.1} parent=1 // pred_check
      _
    $region15: #{decoder_forward.1} parent=1 // pred_check_branch
      %30 = sbr.rel (0) target = $region17
    $region16: #{decoder_forward.1} parent=1 // pred_region
      _
    $region17: #{decoder_forward.1} parent=1 // pred_fallthru
      _
    // Predicated region
    $region18: #{decoder_forward.1} parent=1 // pred_check
      _
    $region19: #{decoder_forward.1} parent=1 // pred_check_branch
      %32 = sbr.rel (0) target = $region21
    $region20: #{decoder_forward.1} parent=1 // pred_region
      _
    $region21: #{decoder_forward.1} parent=1 // pred_fallthru
      _
    // Predicated region
    $region22: #{decoder_forward.1} parent=1 // pred_check
      _
    $region23: #{decoder_forward.1} parent=1 // pred_check_branch
      %34 = sbr.rel (0) target = $region25
    $region24: #{decoder_forward.1} parent=1 // pred_region
      _
    $region25: #{decoder_forward.1} parent=1 // pred_fallthru
      _
    // Predicated region
    $region26: #{decoder_forward.1} parent=1 // pred_check
      _
    $region27: #{decoder_forward.1} parent=1 // pred_check_branch
      %36 = sbr.rel (0) target = $region29
    $region28: #{decoder_forward.1} parent=1 // pred_region
      _
    $region29: #{decoder_forward.1} parent=1 // pred_fallthru
      _
    // Predicated region
    $region30: #{decoder_forward.1} parent=1 // pred_check
      _
    $region31: #{decoder_forward.1} parent=1 // pred_check_branch
      %38 = sbr.rel (0) target = $region33
    $region32: #{decoder_forward.1} parent=1 // pred_region
      %40 = vsyncadd [#allocation3], 0
      %s41 = sshll.u32 %s7, 4
      %s42 = int_to_ptr.hbm [resolvable:$true] %s41
      %s43 = sshll.u32 [#allocation2], 4
      %s44 = int_to_ptr.vmem [resolvable:$true] %s43
      %49 = dma.hbm_to_vmem [thread:$0]  %s42, 512, %s44, [#allocation3], 128, 128, 8
    $region33: #{decoder_forward.1} parent=1 // pred_fallthru
      _
    // Predicated region
    $region34: #{decoder_forward.1} parent=1 // pred_check
      _
    $region35: #{decoder_forward.1} parent=1 // pred_check_branch
      %51 = sbr.rel (0) target = $region37
    $region36: #{decoder_forward.1} parent=1 // pred_region
      _
    $region37: #{decoder_forward.1} parent=1 // pred_fallthru
      _
    // Predicated region
    $region38: #{decoder_forward.1} parent=1 // pred_check
      _
    $region39: #{decoder_forward.1} parent=1 // pred_check_branch
      %53 = sbr.rel (0) target = $region41
    $region40: #{decoder_forward.1} parent=1 // pred_region
      _
    $region41: #{decoder_forward.1} parent=1 // pred_fallthru
      _
    // Predicated region
    $region42: #{decoder_forward.1} parent=1 // pred_check
      _
    $region43: #{decoder_forward.1} parent=1 // pred_check_branch
      %55 = sbr.rel (0) target = $region45
    $region44: #{decoder_forward.1} parent=1 // pred_region
      %57 = vsyncadd [#allocation6], 0
      %s58 = sshll.u32 %s10, 4
      %s59 = int_to_ptr.hbm [resolvable:$true] %s58
      %s60 = sshll.u32 [#allocation5], 4
      %s61 = int_to_ptr.vmem [resolvable:$true] %s60
      %66 = dma.hbm_to_vmem [thread:$0]  %s59, 512, %s61, [#allocation6], 128, 128, 8
    $region45: #{decoder_forward.1} parent=1 // pred_fallthru
      _
    // Predicated region
    $region46: #{decoder_forward.1} parent=1 // pred_check
      _
    $region47: #{decoder_forward.1} parent=1 // pred_check_branch
      %68 = sbr.rel (0) target = $region49
    $region48: #{decoder_forward.1} parent=1 // pred_region
      _
    $region49: #{decoder_forward.1} parent=1 // pred_fallthru
      _
    // Predicated region
    $region50: #{decoder_forward.1} parent=1 // pred_check
      _
    $region51: #{decoder_forward.1} parent=1 // pred_check_branch
      %70 = sbr.rel (0) target = $region53
    $region52: #{decoder_forward.1} parent=1 // pred_region
      %72 = dma.done [#allocation3], 512
    $region53: #{decoder_forward.1} parent=1 // pred_fallthru
      _
    // Predicated region
    $region54: #{decoder_forward.1} parent=1 // pred_check
      _
    $region55: #{decoder_forward.1} parent=1 // pred_check_branch
      %74 = sbr.rel (0) target = $region57
    $region56: #{decoder_forward.1} parent=1 // pred_region
      %76 = dma.done [#allocation6], 512
    $region57: #{decoder_forward.1} parent=1 // pred_fallthru
      _
    %v77 = vld [vmem:[%s0] sm:$0x3]
    %v78 = vlaneseq
    %v79 = vand.u32 %v78, 127
    %80 = vset.pattern.permute.xlu0 0
    %81 = vperm.xlu0 %80, %v77
    %v82 = vpop.permute.xlu0 %81
    %vm83 = vcmp.eq.s32.totalorder %v79, %v82
    %v84 = vsel %vm83, 1, 0
    %v85 = vcvt.s32.f32 %v84
    %v86 = vld [vmem:[%s4] sm:$0xff]
    %v87 = vld [vmem:[%s4 + $0x8] sm:$0xff]
    %v88 = vld [vmem:[%s4 + $0x10] sm:$0xff]
    %v89 = vld [vmem:[%s4 + $0x18] sm:$0xff]
    %v90 = vld [vmem:[%s4 + $0x20] sm:$0xff]
    %v91 = vld [vmem:[%s4 + $0x28] sm:$0xff]
    %v92 = vld [vmem:[%s4 + $0x30] sm:$0x3]
    %v93 = vld [vmem:[%s1] sm:$0x3]
    %v94 = vld [vmem:[%s5] sm:$0xff]
    %v95 = vld [vmem:[%s5 + $0x8] sm:$0xff]
    %v96 = vld [vmem:[%s5 + $0x10] sm:$0xff]
    %v97 = vld [vmem:[%s5 + $0x18] sm:$0xff]
    %vm98 = vcmask 261120
    %v100 = vsel %vm98, %v93, 0
    %102 = vmatpush.msra.mxu0 0.0
    %103 = vmatpush.msra.mxu0 0.0
    %104 = vmatpush.msra.mxu0 0.0
    %105 = vmatpush.msra.mxu0 0.0
    %106 = vmatpush.msra.mxu0 0.0
    %107 = vmatpush.msra.mxu0 0.0
    %108 = vmatpush.msra.mxu0 0.0
    %109 = vmatpush.msra.mxu0 0.0
    %110 = vmatpush.msra.mxu0 0.0
    %111 = vmatpush.msra.mxu0 0.0
    %112 = vmatpush.msra.mxu0 0.0
    %113 = vmatpush.msra.mxu0 0.0
    %114 = vmatpush.msra.mxu0 %v97
    %115 = vmatpush.msra.mxu0 %v96
    %116 = vmatpush.msra.mxu0 %v95
    %117 = vmatpush.msra.mxu0 %v94
    %118 = vmatmul.f32.gmra.mxu0 %v100
    %v119 = vpop.f32.mrf.mxu0
    %v120 = vadd.f32 0.0, %v119
    %121 = vdwg.mxu0
    %vm122 = vcmask 408576
    %v124 = vsel %vm122, %v85, 0
    %vm126 = vcmask 1041408
    %v128 = vsel %vm126, %v92, 0
    %130 = vmatpush.msra.mxu0 0.0
    %131 = vmatpush.msra.mxu0 0.0
    %132 = vmatpush.msra.mxu0 0.0
    %133 = vmatpush.msra.mxu0 0.0
    %134 = vmatpush.msra.mxu0 0.0
    %135 = vmatpush.msra.mxu0 0.0
    %136 = vmatpush.msra.mxu0 0.0
    %137 = vmatpush.msra.mxu0 0.0
    %138 = vmatpush.msra.mxu0 0.0
    %139 = vmatpush.msra.mxu0 %v128
    %140 = vmatpush.msra.mxu0 %v91
    %141 = vmatpush.msra.mxu0 %v90
    %142 = vmatpush.msra.mxu0 %v89
    %143 = vmatpush.msra.mxu0 %v88
    %144 = vmatpush.msra.mxu0 %v87
    %145 = vmatpush.msra.mxu0 %v86
    %146 = vmatmul.f32.gmra.mxu0 %v124
    %v147 = vpop.f32.mrf.mxu0
    %v148 = vadd.f32 %v120, %v147
    %149 = vdwg.mxu0
    %v150 = vld [vmem:[%s6] sm:$0x1]
    %v152 = vperm.slane %v150, 0
    %v154 = vadd.f32 %v148, %v152
    %v155 = vxor.u32 %v154, 2147483648
    %v156 = vmul.f32 %v155, 1.442695
    %v157 = vpow.pop %v156
    %v158 = vadd.f32 %v157, 1.0
    %v159 = vrcp.pop %v158
    %v160 = vmul.f32 %v158, %v159
    %v161 = vsub.f32 1.0, %v160
    %v162 = vmul.f32 %v159, %v161
    %v163 = vadd.f32 %v159, %v162
    %vm164 = vweird.f32 %v158
    %vm165 = vweird.f32 %v159
    %vm166 = vmor %vm164, %vm165
    %v167 = vsel %vm166, %v159, %v163
    %v168 = vand.u32 2147483647, %v158
    %vm169 = vcmp.eq.f32.partialorder %v168, 8.507059e+37
    %v170 = vand.u32 %v158, 2147483648
    %v171 = vor.u32 1.1754944e-38, %v170
    %v172 = vsel %vm169, %v171, %v167
    %v173 = vmul.f32 1.0, %v172
    %v174 = vtanh.pop %v154
    %v175 = vld [vmem:[%s2] sm:$0x3]
    %177 = vrot.lane.b32.xlu0 %v175, 32
    %v178 = vpop.permute.xlu0 %177
    %v180 = vmul.f32 %v173, %v178
    %182 = vrot.lane.b32.xlu0 %v174, 64
    %v183 = vpop.permute.xlu0 %182
    %v185 = vmul.f32 %v173, %v183
    %187 = vrot.lane.b32.xlu0 %v185, 32
    %v188 = vpop.permute.xlu0 %187
    %v190 = vadd.f32 %v180, %v188
    %v191 = vtanh.pop %v190
    %193 = vrot.lane.b32.xlu0 %v191, 64
    %v194 = vpop.permute.xlu0 %193
    %v196 = vmul.f32 %v173, %v194
    %198 = vrot.lane.b32.xlu0 %v196, 32
    %v199 = vpop.permute.xlu0 %198
    %vm201 = vcmask 254976
    %202 = vst.msk [vmem:[%s13] sm:$0x3] %vm201, %v199
    %204 = vrot.lane.b32.xlu0 %v190, 96
    %v205 = vpop.permute.xlu0 %204
    %207 = vst.msk [vmem:[%s14] sm:$0x3] %vm201, %v205
    %v208 = vld [vmem:[#allocation2] sm:$0xff]
    %v209 = vld [vmem:[#allocation2 + $0x8] sm:$0xff]
    %v210 = vld [vmem:[#allocation2 + $0x10] sm:$0xff]
    %v211 = vld [vmem:[#allocation2 + $0x18] sm:$0xff]
    %v212 = vld [vmem:[%s3] sm:$0x3]
    %v213 = vld [vmem:[%s8] sm:$0xff]
    %v214 = vld [vmem:[%s8 + $0x8] sm:$0xff]
    %v215 = vld [vmem:[%s8 + $0x10] sm:$0xff]
    %v216 = vld [vmem:[%s8 + $0x18] sm:$0xff]
    %v217 = vld [vmem:[%s8 + $0x20] sm:$0xff]
    %v218 = vld [vmem:[%s8 + $0x28] sm:$0xff]
    %v219 = vld [vmem:[%s8 + $0x30] sm:$0xff]
    %v220 = vld [vmem:[%s8 + $0x38] sm:$0xff]
    %vm221 = vcmask 523264
    %v223 = vsel %vm221, %v212, 0
    %225 = vmatpush.msra.mxu0 0.0
    %226 = vmatpush.msra.mxu0 0.0
    %227 = vmatpush.msra.mxu0 0.0
    %228 = vmatpush.msra.mxu0 0.0
    %229 = vmatpush.msra.mxu0 0.0
    %230 = vmatpush.msra.mxu0 0.0
    %231 = vmatpush.msra.mxu0 0.0
    %232 = vmatpush.msra.mxu0 0.0
    %233 = vmatpush.msra.mxu0 %v220
    %234 = vmatpush.msra.mxu0 %v219
    %235 = vmatpush.msra.mxu0 %v218
    %236 = vmatpush.msra.mxu0 %v217
    %237 = vmatpush.msra.mxu0 %v216
    %238 = vmatpush.msra.mxu0 %v215
    %239 = vmatpush.msra.mxu0 %v214
    %240 = vmatpush.msra.mxu0 %v213
    %241 = vmatmul.f32.gmra.mxu0 %v223
    %v242 = vpop.f32.mrf.mxu0
    %v243 = vadd.f32 0.0, %v242
    %244 = vdwg.mxu0
    %v245 = vsel %vm98, %v199, 0
    %247 = vmatpush.msra.mxu0 0.0
    %248 = vmatpush.msra.mxu0 0.0
    %249 = vmatpush.msra.mxu0 0.0
    %250 = vmatpush.msra.mxu0 0.0
    %251 = vmatpush.msra.mxu0 0.0
    %252 = vmatpush.msra.mxu0 0.0
    %253 = vmatpush.msra.mxu0 0.0
    %254 = vmatpush.msra.mxu0 0.0
    %255 = vmatpush.msra.mxu0 0.0
    %256 = vmatpush.msra.mxu0 0.0
    %257 = vmatpush.msra.mxu0 0.0
    %258 = vmatpush.msra.mxu0 0.0
    %259 = vmatpush.msra.mxu0 %v211
    %260 = vmatpush.msra.mxu0 %v210
    %261 = vmatpush.msra.mxu0 %v209
    %262 = vmatpush.msra.mxu0 %v208
    %263 = vmatmul.f32.gmra.mxu0 %v245
    %v264 = vpop.f32.mrf.mxu0
    %v265 = vadd.f32 %v243, %v264
    %266 = vdwg.mxu0
    %v267 = vld [vmem:[%s9] sm:$0x1]
    %v269 = vperm.slane %v267, 0
    %v271 = vadd.f32 %v265, %v269
    %v272 = vld [vmem:[#allocation5] sm:$0xff]
    %v273 = vld [vmem:[#allocation5 + $0x8] sm:$0xff]
    %v274 = vld [vmem:[#allocation5 + $0x10] sm:$0xff]
    %v275 = vld [vmem:[#allocation5 + $0x18] sm:$0xff]
    %v276 = vld [vmem:[%s11] sm:$0x1]
    %v278 = vperm.slane %v276, 0
    %v281 = vsel %vm98, %v271, 0
    %283 = vmatpush.msra.mxu0 0.0
    %284 = vmatpush.msra.mxu0 0.0
    %285 = vmatpush.msra.mxu0 0.0
    %286 = vmatpush.msra.mxu0 0.0
    %287 = vmatpush.msra.mxu0 0.0
    %288 = vmatpush.msra.mxu0 0.0
    %289 = vmatpush.msra.mxu0 0.0
    %290 = vmatpush.msra.mxu0 0.0
    %291 = vmatpush.msra.mxu0 0.0
    %292 = vmatpush.msra.mxu0 0.0
    %293 = vmatpush.msra.mxu0 0.0
    %294 = vmatpush.msra.mxu0 0.0
    %295 = vmatpush.msra.mxu0 %v275
    %296 = vmatpush.msra.mxu0 %v274
    %297 = vmatpush.msra.mxu0 %v273
    %298 = vmatpush.msra.mxu0 %v272
    %299 = vmatmul.f32.gmra.mxu0 %v281
    %v300 = vpop.f32.mrf.mxu0
    %v301 = vadd.f32 %v278, %v300
    %302 = vdwg.mxu0
    %v303 = vsel %vm126, %v301, -inf
    %304 = vmax.xlane.f32.xlu0 %v303
    %v305 = vpop.xlane.xlu0 %304
    %v306 = vsub.f32 %v301, %v305
    %v307 = vmul.f32 %v306, 1.442695
    %v308 = vpow.pop %v307
    %v309 = vsel %vm126, %v308, 0.0
    %310 = vadd.xlane.f32.xlu0 %v309
    %v311 = vpop.xlane.xlu0 %310
    %v312 = vrcp.pop %v311
    %v313 = vmul.f32 %v308, %v312
    %314 = vst [vmem:[#allocation7] sm:$0x3] %v313
    // Predicated region
    $region58: #{decoder_forward.1} parent=1 // pred_check
      _
    $region59: #{decoder_forward.1} parent=1 // pred_check_branch
      %316 = sbr.rel (0) target = $region61
    $region60: #{decoder_forward.1} parent=1 // pred_region
      %318 = vsyncadd [#allocation4], 0
      %s320 = sshll.u32 [#allocation7], 4
      %s321 = int_to_ptr.vmem [resolvable:$true] %s320
      %s322 = sshll.u32 %s12, 4
      %s323 = int_to_ptr.hbm [resolvable:$true] %s322
      %325 = dma.vmem_to_hbm [thread:$0]  %s321, 32, %s323, [#allocation4]
    $region61: #{decoder_forward.1} parent=1 // pred_fallthru
      _
    // Predicated region
    $region62: #{decoder_forward.1} parent=1 // pred_check
      _
    $region63: #{decoder_forward.1} parent=1 // pred_check_branch
      %327 = sbr.rel (0) target = $region65
    $region64: #{decoder_forward.1} parent=1 // pred_region
      _
    $region65: #{decoder_forward.1} parent=1 // pred_fallthru
      _
    // Predicated region
    $region66: #{decoder_forward.1} parent=1 // pred_check
      _
    $region67: #{decoder_forward.1} parent=1 // pred_check_branch
      %329 = sbr.rel (0) target = $region69
    $region68: #{decoder_forward.1} parent=1 // pred_region
      _
    $region69: #{decoder_forward.1} parent=1 // pred_fallthru
      _
    // Predicated region
    $region70: #{decoder_forward.1} parent=1 // pred_check
      _
    $region71: #{decoder_forward.1} parent=1 // pred_check_branch
      %331 = sbr.rel (0) target = $region73
    $region72: #{decoder_forward.1} parent=1 // pred_region
      %333 = dma.done [#allocation4], 32
    $region73: #{decoder_forward.1} parent=1 // pred_fallthru
      _
    // Predicated region
    $region74: #{decoder_forward.1} parent=1 // pred_check
      _
    $region75: #{decoder_forward.1} parent=1 // pred_check_branch
      %335 = sbr.rel (0) target = $region77
    $region76: #{decoder_forward.1} parent=1 // pred_region
      _
    $region77: #{decoder_forward.1} parent=1 // pred_fallthru
      _
    // Predicated region
    $region78: #{decoder_forward.1} parent=1 // pred_check
      _
    $region79: #{decoder_forward.1} parent=1 // pred_check_branch
      %337 = sbr.rel (0) target = $region81
    $region80: #{decoder_forward.1} parent=1 // pred_region
      _
    $region81: #{decoder_forward.1} parent=1 // pred_fallthru
      _
    %338 = vsyncpa [#allocation3], 1
    %339 = vsyncpa [#allocation6], 1
    %340 = vsyncpa [#allocation4], 1

</llo_original>
